<compile_context>
chip_gen: v7x
topology: tpu7x:2x2x1
jax: 0.10.0
libtpu: 0.0.40
codegen_flags: <defaults>
</compile_context>

<pallas_src>
import math
from functools import partial

import jax
import jax.numpy as jnp
from jax.experimental import pallas as pl
from jax.experimental.pallas import tpu as pltpu

_LANE = 128


def _lane_roll_right(a, shift, size):
    # out[:, l] = a[:, (l - shift) % size]
    shift = shift % size
    if shift == 0:
        return a
    if size % _LANE == 0:
        # XLU rotate: separate VLIW slot from the VALU doing the compares/adds.
        return pltpu.roll(a, shift=shift, axis=1)
    # Fallback for non-lane-dense layouts: explicit slice + concat.
    return jnp.concatenate([a[:, size - shift:], a[:, :size - shift]], axis=1)


def _pruner_kernel(x_ref, o_ref, acc_ref, *, n, m, inv_lead):
    k = pl.program_id(1)

    # ---- streaming reduction: sum |x| over the (B*C) axis -------------------
    @pl.when(k == 0)
    def _():
        acc_ref[...] = jnp.zeros_like(acc_ref)

    # x_ref block: (1, KFOLD, tile_rows, wp); upcast to f32 only in-kernel.
    acc_ref[...] += jnp.sum(jnp.abs(x_ref[0].astype(jnp.float32)), axis=0)

    # ---- finalize: mean, then N:M top-k mask over contiguous groups of m ----
    @pl.when(k == pl.num_programs(1) - 1)
    def _():
        tr, wp = acc_ref.shape
        y = acc_ref[...] * inv_lead               # mean over (B, C); y >= 0
        pos = jax.lax.broadcasted_iota(jnp.int32, (tr, wp), 1) % m
        rank = jnp.zeros((tr, wp), jnp.int32)
        # rank[e] = #{group-mates that beat e} (strictly larger, or equal with
        # lower index -> matches torch.topk's lower-index tie preference).
        for s in range(1, m):
            lower = pos >= s                           # mate has a lower index
            a_shift = _lane_roll_right(y, s, wp)       # mate at pos-s   (valid if pos >= s)
            b_shift = _lane_roll_right(y, s - m, wp)   # mate at pos-s+m (valid if pos <  s)
            other = jnp.where(lower, a_shift, b_shift)
            beaten = (other > y) | ((other == y) & lower)
            rank = rank + beaten.astype(jnp.int32)
        o_ref[...] = (rank < n).astype(o_ref.dtype)


def _choose_wp(total, m, last_dim):
    """Lane width: a multiple of lcm(m, 128) dividing the plane size
    (lane-dense), preferring one whose row count is a multiple of 8 so the
    spatial axis can be sublane-tiled."""
    base = (m * _LANE) // math.gcd(m, _LANE)
    cands = [w for w in range(base, min(2048, total) + 1, base) if total % w == 0]
    if cands:
        tileable = [w for w in cands if (total // w) % 8 == 0]
        return max(tileable) if tileable else max(cands)
    # Fallbacks keep each M-group contiguous within one row (original paths).
    if last_dim % m == 0:
        return last_dim
    return m


def _choose_tile_rows(rows, wp):
    """Spatial row tile: multiple of 8 sublanes, modest epilogue working set,
    and >= 2 tiles when possible so v7x can shard across its 2 TensorCores."""
    if rows % 8 != 0 or rows < 16:
        return rows
    cap = max(8, min(rows // 2, (256 * 1024) // (wp * 4)))
    best = 8
    t = 8
    while t <= cap:
        if rows % t == 0:
            best = t
        t += 8
    return best


def _choose_kfold(lead, slice_bytes, budget_bytes=4 << 20):
    """Number of leading (B*C) slices folded into one input block: largest
    divisor of `lead` whose block stays ~4 MiB (double-buffers to ~8 MiB,
    safe inside scoped VMEM on v5e/v6e/v7x)."""
    kmax = max(1, min(lead, budget_bytes // max(slice_bytes, 1)))
    best = 1
    for cand in range(1, kmax + 1):
        if lead % cand == 0:
            best = cand
    return best


def lsq_act_pruner_forward(x, n=4, m=8):
    """Pallas implementation of LSQActPruner.forward (quantizer branch is dead code)."""
    assert x.ndim >= 3, "expect at least (B, C, spatial...)"
    lead = x.shape[0] * x.shape[1]
    plane_shape = x.shape[2:]
    total = math.prod(plane_shape)
    if total % m != 0:
        raise ValueError("x//M !!")

    wp = _choose_wp(total, m, plane_shape[-1])
    rows = total // wp
    tile_rows = _choose_tile_rows(rows, wp)
    num_row_tiles = rows // tile_rows

    kfold = _choose_kfold(lead, tile_rows * wp * x.dtype.itemsize)
    num_k_steps = lead // kfold

    # Row-major reshape only (free): leading axes enumerate (B*C), trailing
    # axes enumerate the spatial plane, so both the mean and the contiguous
    # M-grouping match PyTorch's view(-1, M) exactly.
    xr = x.reshape(num_k_steps, kfold, rows, wp)

    kernel = partial(_pruner_kernel, n=n, m=m, inv_lead=1.0 / lead)
    mask = pl.pallas_call(
        kernel,
        out_shape=jax.ShapeDtypeStruct((rows, wp), jnp.float32),
        grid_spec=pltpu.PrefetchScalarGridSpec(
            num_scalar_prefetch=0,
            grid=(num_row_tiles, num_k_steps),          # reduction axis last
            in_specs=[pl.BlockSpec((1, kfold, tile_rows, wp),
                                   lambda r, k: (k, 0, r, 0))],
            out_specs=pl.BlockSpec((tile_rows, wp), lambda r, k: (r, 0)),
            scratch_shapes=[pltpu.VMEM((tile_rows, wp), jnp.float32)],
        ),
        compiler_params=pltpu.CompilerParams(
            dimension_semantics=("parallel", "arbitrary"),
            vmem_limit_bytes=32 * 1024 * 1024),
    )(xr)
    return mask.reshape(plane_shape)


def _reference(x, n=4, m=8):
    # Pure-JAX reference mirroring the PyTorch code.
    y = jnp.abs(x).mean(axis=(0, 1))
    flat = jnp.abs(y).reshape(-1, m)
    _, idx = jax.lax.top_k(flat, n)
    mask = jnp.zeros_like(flat).at[jnp.arange(flat.shape[0])[:, None], idx].set(1.0)
    return mask.reshape(y.shape)


if __name__ == "__main__":
    key = jax.random.PRNGKey(0)
    x = jax.random.normal(key, (2, 4, 16, 16), dtype=jnp.float32)  # NCHW

    out = lsq_act_pruner_forward(x, n=4, m=8)
    out = jax.block_until_ready(out)

    ref = _reference(x, n=4, m=8)
    assert out.shape == (16, 16)
    assert out.dtype == jnp.float32
    assert bool(jnp.array_equal(out, ref)), "mismatch vs pure-JAX reference"
    # exactly n ones per group of m
    assert bool(jnp.all(out.reshape(-1, 8).sum(axis=1) == 4))
    print("KERNEL_OK")
</pallas_src>

<mosaic_0001>
module attributes {stable_mosaic.version = 11 : i64} {
  func.func @_pruner_kernel(%arg0: i32, %arg1: i32, %arg2: memref<1x8x1x256xf32, #tpu.memory_space<vmem>>, %arg3: memref<1x256xf32, #tpu.memory_space<vmem>>, %arg4: memref<1x256xf32, #tpu.memory_space<vmem>>) attributes {dimension_semantics = [#tpu.dimension_semantics<parallel>, #tpu.dimension_semantics<arbitrary>], iteration_bounds = array<i64: 1, 1>, scalar_prefetch = 0 : i64, scratch_operands = 1 : i64, tpu.core_type = #tpu.core_type<tc>, window_params = [{transform_indices = @transform_0, window_bounds = array<i64: 1, 8, 1, 256>}, {transform_indices = @transform_1, window_bounds = array<i64: 1, 256>}]} {
    %c0_i32 = arith.constant 0 : i32
    %0 = arith.cmpi eq, %arg1, %c0_i32 : i32
    %1 = arith.extui %0 : i1 to i32
    %c0_i32_0 = arith.constant 0 : i32
    %2 = arith.cmpi ne, %1, %c0_i32_0 : i32
    scf.if %2 {
      %cst_10 = arith.constant 0.000000e+00 : f32
      %13 = vector.broadcast %cst_10 : f32 to vector<1x256xf32>
      %c0_11 = arith.constant 0 : index
      %c0_12 = arith.constant 0 : index
      %14 = vector.load %arg4[%c0_11, %c0_12] : memref<1x256xf32, #tpu.memory_space<vmem>>, vector<1x256xf32>
      tpu.vector_store %arg4[%c0_11, %c0_12], %13 {strides = array<i32>} : memref<1x256xf32, #tpu.memory_space<vmem>>, vector<1x256xf32>,
    } else {
    }
    %c0 = arith.constant 0 : index
    %c0_1 = arith.constant 0 : index
    %3 = vector.load %arg4[%c0, %c0_1] : memref<1x256xf32, #tpu.memory_space<vmem>>, vector<1x256xf32>
    %c0_2 = arith.constant 0 : index
    %c0_3 = arith.constant 0 : index
    %c0_4 = arith.constant 0 : index
    %c0_5 = arith.constant 0 : index
    %4 = vector.load %arg2[%c0_2, %c0_3, %c0_4, %c0_5] : memref<1x8x1x256xf32, #tpu.memory_space<vmem>>, vector<1x8x1x256xf32>
    %5 = vector.shape_cast %4 : vector<1x8x1x256xf32> to vector<8x1x256xf32>
    %6 = math.absf %5 : vector<8x1x256xf32>
    %cst = arith.constant dense<0.000000e+00> : vector<1x256xf32>
    %7 = vector.multi_reduction <add>, %6, %cst [0] : vector<8x1x256xf32> to vector<1x256xf32>
    %8 = arith.addf %3, %7 : vector<1x256xf32>
    %c0_6 = arith.constant 0 : index
    %c0_7 = arith.constant 0 : index
    %9 = vector.load %arg4[%c0_6, %c0_7] : memref<1x256xf32, #tpu.memory_space<vmem>>, vector<1x256xf32>
    tpu.vector_store %arg4[%c0_6, %c0_7], %8 {strides = array<i32>} : memref<1x256xf32, #tpu.memory_space<vmem>>, vector<1x256xf32>,
    %c0_i32_8 = arith.constant 0 : i32
    %10 = arith.cmpi eq, %arg1, %c0_i32_8 : i32
    %11 = arith.extui %10 : i1 to i32
    %c0_i32_9 = arith.constant 0 : i32
    %12 = arith.cmpi ne, %11, %c0_i32_9 : i32
    scf.if %12 {
      %c0_10 = arith.constant 0 : index
      %c0_11 = arith.constant 0 : index
      %13 = vector.load %arg4[%c0_10, %c0_11] : memref<1x256xf32, #tpu.memory_space<vmem>>, vector<1x256xf32>
      %cst_12 = arith.constant 1.250000e-01 : f32
      %14 = vector.broadcast %cst_12 : f32 to vector<1x256xf32>
      %15 = arith.mulf %13, %14 : vector<1x256xf32>
      %16 = tpu.iota {dimensions = array<i32: 1>} : vector<1x256xi32>
      %c8_i32 = arith.constant 8 : i32
      %c0_i32_13 = arith.constant 0 : i32
      %17 = arith.cmpi eq, %c8_i32, %c0_i32_13 : i32
      %c1_i32 = arith.constant 1 : i32
      %18 = arith.select %17, %c1_i32, %c8_i32 : i32
      %19 = vector.broadcast %18 : i32 to vector<1x256xi32>
      %20 = arith.remsi %16, %19 : vector<1x256xi32>
      %c0_i32_14 = arith.constant 0 : i32
      %21 = vector.broadcast %c0_i32_14 : i32 to vector<1x256xi32>
      %22 = arith.cmpi ne, %20, %21 : vector<1x256xi32>
      %c0_i32_15 = arith.constant 0 : i32
      %23 = vector.broadcast %c0_i32_15 : i32 to vector<1x256xi32>
      %24 = arith.cmpi slt, %20, %23 : vector<1x256xi32>
      %c0_i32_16 = arith.constant 0 : i32
      %25 = arith.cmpi slt, %18, %c0_i32_16 : i32
      %26 = vector.broadcast %25 : i1 to vector<1x256xi1>
      %27 = vector.broadcast %26 : vector<1x256xi1> to vector<1x256xi1>
      %28 = arith.xori %24, %27 : vector<1x256xi1>
      %29 = arith.andi %28, %22 : vector<1x256xi1>
      %30 = vector.broadcast %18 : i32 to vector<1x256xi32>
      %31 = arith.addi %20, %30 : vector<1x256xi32>
      %32 = arith.select %29, %31, %20 : vector<1x256xi1>, vector<1x256xi32>
      %c0_i32_17 = arith.constant 0 : i32
      %33 = vector.broadcast %c0_i32_17 : i32 to vector<1x256xi32>
      %c1_i32_18 = arith.constant 1 : i32
      %34 = vector.broadcast %c1_i32_18 : i32 to vector<1x256xi32>
      %35 = arith.cmpi sge, %32, %34 : vector<1x256xi32>
      %c1_i32_19 = arith.constant 1 : i32
      %36 = tpu.dynamic_rotate %15 by %c1_i32_19 dim 1 : vector<1x256xf32>, i32 -> vector<1x256xf32>
      %c249_i32 = arith.constant 249 : i32
      %37 = tpu.dynamic_rotate %15 by %c249_i32 dim 1 : vector<1x256xf32>, i32 -> vector<1x256xf32>
      %38 = arith.select %35, %36, %37 : vector<1x256xi1>, vector<1x256xf32>
      %39 = arith.cmpf ogt, %38, %15 : vector<1x256xf32>
      %40 = arith.cmpf oeq, %38, %15 : vector<1x256xf32>
      %41 = arith.andi %40, %35 : vector<1x256xi1>
      %42 = arith.ori %39, %41 : vector<1x256xi1>
      %43 = arith.extui %42 : vector<1x256xi1> to vector<1x256xi32>
      %44 = arith.addi %33, %43 : vector<1x256xi32>
      %c2_i32 = arith.constant 2 : i32
      %45 = vector.broadcast %c2_i32 : i32 to vector<1x256xi32>
      %46 = arith.cmpi sge, %32, %45 : vector<1x256xi32>
      %c2_i32_20 = arith.constant 2 : i32
      %47 = tpu.dynamic_rotate %15 by %c2_i32_20 dim 1 : vector<1x256xf32>, i32 -> vector<1x256xf32>
      %c250_i32 = arith.constant 250 : i32
      %48 = tpu.dynamic_rotate %15 by %c250_i32 dim 1 : vector<1x256xf32>, i32 -> vector<1x256xf32>
      %49 = arith.select %46, %47, %48 : vector<1x256xi1>, vector<1x256xf32>
      %50 = arith.cmpf ogt, %49, %15 : vector<1x256xf32>
      %51 = arith.cmpf oeq, %49, %15 : vector<1x256xf32>
      %52 = arith.andi %51, %46 : vector<1x256xi1>
      %53 = arith.ori %50, %52 : vector<1x256xi1>
      %54 = arith.extui %53 : vector<1x256xi1> to vector<1x256xi32>
      %55 = arith.addi %44, %54 : vector<1x256xi32>
      %c3_i32 = arith.constant 3 : i32
      %56 = vector.broadcast %c3_i32 : i32 to vector<1x256xi32>
      %57 = arith.cmpi sge, %32, %56 : vector<1x256xi32>
      %c3_i32_21 = arith.constant 3 : i32
      %58 = tpu.dynamic_rotate %15 by %c3_i32_21 dim 1 : vector<1x256xf32>, i32 -> vector<1x256xf32>
      %c251_i32 = arith.constant 251 : i32
      %59 = tpu.dynamic_rotate %15 by %c251_i32 dim 1 : vector<1x256xf32>, i32 -> vector<1x256xf32>
      %60 = arith.select %57, %58, %59 : vector<1x256xi1>, vector<1x256xf32>
      %61 = arith.cmpf ogt, %60, %15 : vector<1x256xf32>
      %62 = arith.cmpf oeq, %60, %15 : vector<1x256xf32>
      %63 = arith.andi %62, %57 : vector<1x256xi1>
      %64 = arith.ori %61, %63 : vector<1x256xi1>
      %65 = arith.extui %64 : vector<1x256xi1> to vector<1x256xi32>
      %66 = arith.addi %55, %65 : vector<1x256xi32>
      %c4_i32 = arith.constant 4 : i32
      %67 = vector.broadcast %c4_i32 : i32 to vector<1x256xi32>
      %68 = arith.cmpi sge, %32, %67 : vector<1x256xi32>
      %c4_i32_22 = arith.constant 4 : i32
      %69 = tpu.dynamic_rotate %15 by %c4_i32_22 dim 1 : vector<1x256xf32>, i32 -> vector<1x256xf32>
      %c252_i32 = arith.constant 252 : i32
      %70 = tpu.dynamic_rotate %15 by %c252_i32 dim 1 : vector<1x256xf32>, i32 -> vector<1x256xf32>
      %71 = arith.select %68, %69, %70 : vector<1x256xi1>, vector<1x256xf32>
      %72 = arith.cmpf ogt, %71, %15 : vector<1x256xf32>
      %73 = arith.cmpf oeq, %71, %15 : vector<1x256xf32>
      %74 = arith.andi %73, %68 : vector<1x256xi1>
      %75 = arith.ori %72, %74 : vector<1x256xi1>
      %76 = arith.extui %75 : vector<1x256xi1> to vector<1x256xi32>
      %77 = arith.addi %66, %76 : vector<1x256xi32>
      %c5_i32 = arith.constant 5 : i32
      %78 = vector.broadcast %c5_i32 : i32 to vector<1x256xi32>
      %79 = arith.cmpi sge, %32, %78 : vector<1x256xi32>
      %c5_i32_23 = arith.constant 5 : i32
      %80 = tpu.dynamic_rotate %15 by %c5_i32_23 dim 1 : vector<1x256xf32>, i32 -> vector<1x256xf32>
      %c253_i32 = arith.constant 253 : i32
      %81 = tpu.dynamic_rotate %15 by %c253_i32 dim 1 : vector<1x256xf32>, i32 -> vector<1x256xf32>
      %82 = arith.select %79, %80, %81 : vector<1x256xi1>, vector<1x256xf32>
      %83 = arith.cmpf ogt, %82, %15 : vector<1x256xf32>
      %84 = arith.cmpf oeq, %82, %15 : vector<1x256xf32>
      %85 = arith.andi %84, %79 : vector<1x256xi1>
      %86 = arith.ori %83, %85 : vector<1x256xi1>
      %87 = arith.extui %86 : vector<1x256xi1> to vector<1x256xi32>
      %88 = arith.addi %77, %87 : vector<1x256xi32>
      %c6_i32 = arith.constant 6 : i32
      %89 = vector.broadcast %c6_i32 : i32 to vector<1x256xi32>
      %90 = arith.cmpi sge, %32, %89 : vector<1x256xi32>
      %c6_i32_24 = arith.constant 6 : i32
      %91 = tpu.dynamic_rotate %15 by %c6_i32_24 dim 1 : vector<1x256xf32>, i32 -> vector<1x256xf32>
      %c254_i32 = arith.constant 254 : i32
      %92 = tpu.dynamic_rotate %15 by %c254_i32 dim 1 : vector<1x256xf32>, i32 -> vector<1x256xf32>
      %93 = arith.select %90, %91, %92 : vector<1x256xi1>, vector<1x256xf32>
      %94 = arith.cmpf ogt, %93, %15 : vector<1x256xf32>
      %95 = arith.cmpf oeq, %93, %15 : vector<1x256xf32>
      %96 = arith.andi %95, %90 : vector<1x256xi1>
      %97 = arith.ori %94, %96 : vector<1x256xi1>
      %98 = arith.extui %97 : vector<1x256xi1> to vector<1x256xi32>
      %99 = arith.addi %88, %98 : vector<1x256xi32>
      %c7_i32 = arith.constant 7 : i32
      %100 = vector.broadcast %c7_i32 : i32 to vector<1x256xi32>
      %101 = arith.cmpi sge, %32, %100 : vector<1x256xi32>
      %c7_i32_25 = arith.constant 7 : i32
      %102 = tpu.dynamic_rotate %15 by %c7_i32_25 dim 1 : vector<1x256xf32>, i32 -> vector<1x256xf32>
      %c255_i32 = arith.constant 255 : i32
      %103 = tpu.dynamic_rotate %15 by %c255_i32 dim 1 : vector<1x256xf32>, i32 -> vector<1x256xf32>
      %104 = arith.select %101, %102, %103 : vector<1x256xi1>, vector<1x256xf32>
      %105 = arith.cmpf ogt, %104, %15 : vector<1x256xf32>
      %106 = arith.cmpf oeq, %104, %15 : vector<1x256xf32>
      %107 = arith.andi %106, %101 : vector<1x256xi1>
      %108 = arith.ori %105, %107 : vector<1x256xi1>
      %109 = arith.extui %108 : vector<1x256xi1> to vector<1x256xi32>
      %110 = arith.addi %99, %109 : vector<1x256xi32>
      %c4_i32_26 = arith.constant 4 : i32
      %111 = vector.broadcast %c4_i32_26 : i32 to vector<1x256xi32>
      %112 = arith.cmpi slt, %110, %111 : vector<1x256xi32>
      %113 = arith.extui %112 : vector<1x256xi1> to vector<1x256xi32>
      %114 = arith.sitofp %113 : vector<1x256xi32> to vector<1x256xf32>
      %c0_27 = arith.constant 0 : index
      %c0_28 = arith.constant 0 : index
      %115 = vector.load %arg3[%c0_27, %c0_28] : memref<1x256xf32, #tpu.memory_space<vmem>>, vector<1x256xf32>
      tpu.vector_store %arg3[%c0_27, %c0_28], %114 {strides = array<i32>} : memref<1x256xf32, #tpu.memory_space<vmem>>, vector<1x256xf32>,
    } else {
    }
    return
  }
  func.func @transform_0(%arg0: i32, %arg1: i32) -> (i32, i32, i32, i32) {
    %c0_i32 = arith.constant 0 : i32
    %c0_i32_0 = arith.constant 0 : i32
    %c0_i32_1 = arith.constant 0 : i32
    return %arg1, %c0_i32, %arg0, %c0_i32_0 : i32, i32, i32, i32
  }
  func.func @transform_1(%arg0: i32, %arg1: i32) -> (i32, i32) {
    %c0_i32 = arith.constant 0 : i32
    %c0_i32_0 = arith.constant 0 : i32
    return %arg0, %c0_i32 : i32, i32
  }
}

</mosaic_0001>

<llo_original>
// kernel: tpu_custom_call.1
$region0: #{tpu_custom_call.1}
  #allocation0 [shape = 'u32[]', space=smem, size = 0x4, offset = 0x4, fixed_abs, tag = 'smem constant byte address 0x4 - core index']
  #allocation1 [shape = 'u32[144,128]{1,0:T(1,128)}', space=vmem, size = 0x12000, scoped, tag = 'internal scratch']
  #allocation2 [shape = 'f32[1,256]{1,0:T(1,128)}', space=vmem, size = 0x400, scoped, tag = 'scratch operand']
  %s0 = inlined_call_operand.hbm [shape: f32[1,8,1,256], index: 0, kind: input, shape index: {}]
  %s1 = inlined_call_operand.hbm [shape: f32[1,256], index: 1, kind: output, shape index: {}]
  %s2 = sld [smem:[#allocation0]]
  $region26: #{tpu_custom_call.1} parent=0
    _
  %s4 = ssub.s32 1, %s2
  %s5 = scalar_select 0, %s4, %s2
  $region1: #{tpu_custom_call.1} parent=0
    #allocation3 [shape = 'u8[8192]{0}', space=vmem, size = 0x2000, scoped, tag = 'input window, operand 0, single buffered']
    #allocation4 [shape = 's32[1]{0}', space=sflag, size = 0x4, scoped, tag = 'scoped memory for tpu_custom_call.1']
    #allocation5 [shape = 's32[1]{0}', space=sflag, size = 0x4, scoped, tag = 'scoped memory for tpu_custom_call.1']
    #allocation6 [shape = 'u8[1024]{0}', space=vmem, size = 0x400, scoped, tag = 'output window, operand 0, single buffered']
    %6 = vsyncpa [#allocation4], 0
    %7 = vsyncpa [#allocation5], 0
    // Predicated region
    $region2: #{tpu_custom_call.1} parent=1 // pred_check
      _
    $region3: #{tpu_custom_call.1} parent=1 // pred_check_branch
      %9 = sbr.rel (0) target = $region5
    $region4: #{tpu_custom_call.1} parent=1 // pred_region
      %s11 = ssub.s32 256, 256
      %12 = vsyncadd [#allocation4], %s11
      %s13 = sshll.u32 [#allocation3], 4
      %s14 = int_to_ptr.vmem [resolvable:$true] %s13
      %19 = dma.hbm_to_vmem [thread:$0]  %s0, 256, %s14, [#allocation4], 32, 32, 2
    $region5: #{tpu_custom_call.1} parent=1 // pred_fallthru
      _
    // Predicated region
    $region6: #{tpu_custom_call.1} parent=1 // pred_check
      _
    $region7: #{tpu_custom_call.1} parent=1 // pred_check_branch
      %21 = sbr.rel (0) target = $region9
    $region8: #{tpu_custom_call.1} parent=1 // pred_region
      %22 = dma.done [#allocation4], 256
    $region9: #{tpu_custom_call.1} parent=1 // pred_fallthru
      _
    %p23 = scmp.eq.s32.totalorder 0, 0
    // Predicated region
    $region10: #{tpu_custom_call.1} parent=1 // pred_check
      %p24 = pneg %p23
    $region11: #{tpu_custom_call.1} parent=1 // pred_check_branch
      %26 = sbr.rel (%p24) target = $region13
    $region12: #{tpu_custom_call.1} parent=1 // pred_region
      %v27 = vlaneseq
      %vm28 = vcmp.ge.s32.totalorder %v27, 0
      %vm29 = vcmp.lt.s32.totalorder %v27, 256
      %vm30 = vmand %vm28, %vm29
      %31 = vst.msk [vmem:[#allocation2] sm:$0x3] %vm30, 0.0
    $region13: #{tpu_custom_call.1} parent=1 // pred_fallthru
      _
    %v32 = vld [vmem:[#allocation2] sm:$0x3]
    %v33 = vld [vmem:[#allocation3] sm:$0x3]
    %v34 = vld [vmem:[#allocation3 + $0x2] sm:$0x3]
    %v35 = vld [vmem:[#allocation3 + $0x4] sm:$0x3]
    %v36 = vld [vmem:[#allocation3 + $0x6] sm:$0x3]
    %v37 = vld [vmem:[#allocation3 + $0x8] sm:$0x3]
    %v38 = vld [vmem:[#allocation3 + $0xa] sm:$0x3]
    %v39 = vld [vmem:[#allocation3 + $0xc] sm:$0x3]
    %v40 = vld [vmem:[#allocation3 + $0xe] sm:$0x3]
    %v41 = vand.u32 2147483647, %v33
    %v42 = vand.u32 2147483647, %v34
    %v43 = vand.u32 2147483647, %v35
    %v44 = vand.u32 2147483647, %v36
    %v45 = vand.u32 2147483647, %v37
    %v46 = vand.u32 2147483647, %v38
    %v47 = vand.u32 2147483647, %v39
    %v48 = vand.u32 2147483647, %v40
    %v57 = vlaneseq
    %v58 = vshrl.u32 %v57, 7
    %v59 = vsub.s32 0, %v58
    %v60 = vrot.slane %v41, %v59
    %v61 = vlaneseq
    %v62 = vshrl.u32 %v61, 7
    %v63 = vsub.s32 1, %v62
    %v64 = vrot.slane %v41, %v63
    %v65 = vlaneseq
    %v66 = vshrl.u32 %v65, 7
    %v67 = vsub.s32 0, %v66
    %v68 = vrot.slane %v42, %v67
    %v69 = vlaneseq
    %v70 = vshrl.u32 %v69, 7
    %v71 = vsub.s32 1, %v70
    %v72 = vrot.slane %v42, %v71
    %v73 = vlaneseq
    %v74 = vshrl.u32 %v73, 7
    %v75 = vsub.s32 0, %v74
    %v76 = vrot.slane %v43, %v75
    %v77 = vlaneseq
    %v78 = vshrl.u32 %v77, 7
    %v79 = vsub.s32 1, %v78
    %v80 = vrot.slane %v43, %v79
    %v81 = vlaneseq
    %v82 = vshrl.u32 %v81, 7
    %v83 = vsub.s32 0, %v82
    %v84 = vrot.slane %v44, %v83
    %v85 = vlaneseq
    %v86 = vshrl.u32 %v85, 7
    %v87 = vsub.s32 1, %v86
    %v88 = vrot.slane %v44, %v87
    %v89 = vlaneseq
    %v90 = vshrl.u32 %v89, 7
    %v91 = vsub.s32 0, %v90
    %v92 = vrot.slane %v45, %v91
    %v93 = vlaneseq
    %v94 = vshrl.u32 %v93, 7
    %v95 = vsub.s32 1, %v94
    %v96 = vrot.slane %v45, %v95
    %v97 = vlaneseq
    %v98 = vshrl.u32 %v97, 7
    %v99 = vsub.s32 0, %v98
    %v100 = vrot.slane %v46, %v99
    %v101 = vlaneseq
    %v102 = vshrl.u32 %v101, 7
    %v103 = vsub.s32 1, %v102
    %v104 = vrot.slane %v46, %v103
    %v105 = vlaneseq
    %v106 = vshrl.u32 %v105, 7
    %v107 = vsub.s32 0, %v106
    %v108 = vrot.slane %v47, %v107
    %v109 = vlaneseq
    %v110 = vshrl.u32 %v109, 7
    %v111 = vsub.s32 1, %v110
    %v112 = vrot.slane %v47, %v111
    %v113 = vlaneseq
    %v114 = vshrl.u32 %v113, 7
    %v115 = vsub.s32 0, %v114
    %v116 = vrot.slane %v48, %v115
    %v117 = vlaneseq
    %v118 = vshrl.u32 %v117, 7
    %v119 = vsub.s32 1, %v118
    %v120 = vrot.slane %v48, %v119
    %vm137 = vcmask 1040384
    %v138 = vsel %vm137, %v60, 0.0
    %v139 = vsel %vm137, %v68, 0.0
    %v140 = vadd.f32 %v138, %v139
    %v141 = vsel %vm137, %v76, 0.0
    %v142 = vadd.f32 %v140, %v141
    %v143 = vsel %vm137, %v84, 0.0
    %v144 = vadd.f32 %v142, %v143
    %v145 = vsel %vm137, %v92, 0.0
    %v146 = vadd.f32 %v144, %v145
    %v147 = vsel %vm137, %v100, 0.0
    %v148 = vadd.f32 %v146, %v147
    %v149 = vsel %vm137, %v108, 0.0
    %v150 = vadd.f32 %v148, %v149
    %v151 = vsel %vm137, %v116, 0.0
    %v152 = vadd.f32 %v150, %v151
    %v153 = vsel %vm137, %v64, 0.0
    %v154 = vsel %vm137, %v72, 0.0
    %v155 = vadd.f32 %v153, %v154
    %v156 = vsel %vm137, %v80, 0.0
    %v157 = vadd.f32 %v155, %v156
    %v158 = vsel %vm137, %v88, 0.0
    %v159 = vadd.f32 %v157, %v158
    %v160 = vsel %vm137, %v96, 0.0
    %v161 = vadd.f32 %v159, %v160
    %v162 = vsel %vm137, %v104, 0.0
    %v163 = vadd.f32 %v161, %v162
    %v164 = vsel %vm137, %v112, 0.0
    %v165 = vadd.f32 %v163, %v164
    %v166 = vsel %vm137, %v120, 0.0
    %v167 = vadd.f32 %v165, %v166
    %v170 = vcombine.low %v152, %v167
    %v172 = vunpack.c.l.s4 1966171168
    %v173 = vunpack.c.0.s8 %v172
    %v174 = vlaneseq
    %v175 = vshrl.u32 %v174, 7
    %v176 = vsub.s32 %v173, %v175
    %v177 = vrot.slane %v170, %v176
    %v179 = vunpack.c.l.s4 1966171168
    %v180 = vunpack.c.0.s8 %v179
    %v181 = vlaneseq
    %v182 = vshrl.u32 %v181, 7
    %v183 = vsub.s32 %v180, %v182
    %v184 = vrot.slane %v177, %v183
    %v186 = vadd.f32 %v32, %v184
    %v187 = vlaneseq
    %vm188 = vcmp.ge.s32.totalorder %v187, 0
    %vm189 = vcmp.lt.s32.totalorder %v187, 256
    %vm190 = vmand %vm188, %vm189
    %191 = vst.msk [vmem:[#allocation2] sm:$0x3] %vm190, %v186
    // Predicated region
    $region14: #{tpu_custom_call.1} parent=1 // pred_check
      %p192 = pneg %p23
    $region15: #{tpu_custom_call.1} parent=1 // pred_check_branch
      %194 = sbr.rel (%p192) target = $region17
    $region16: #{tpu_custom_call.1} parent=1 // pred_region
      %v195 = vld [vmem:[#allocation2] sm:$0x3]
      %v196 = vmul.f32 %v195, 0.125
      %v197 = vlaneseq
      %v198 = vand.u32 %v197, 127
      %v199 = vadd.s32 %v198, 128
      %vm200 = vcmp.lt.s32.totalorder %v198, 0
      %v201 = vsub.s32 0, %v198
      %v202 = vsel %vm200, %v201, %v198
      %v203 = vshrl.u32 %v202, 3
      %v204 = vand.u32 %v202, 7
      %v205 = vsub.s32 0, %v204
      %v206 = vsel %vm200, %v205, %v204
      %vm207 = vcmp.lt.s32.totalorder %v199, 0
      %v208 = vsub.s32 0, %v199
      %v209 = vsel %vm207, %v208, %v199
      %v210 = vshrl.u32 %v209, 3
      %v211 = vand.u32 %v209, 7
      %v212 = vsub.s32 0, %v211
      %v213 = vsel %vm207, %v212, %v211
      %vm214 = vcmp.ne.s32.totalorder %v206, 0
      %vm215 = vcmp.ne.s32.totalorder %v213, 0
      %vm216 = vcmp.lt.s32.totalorder %v206, 0
      %vm217 = vcmp.lt.s32.totalorder %v213, 0
      %vm218 = vmand %vm216, %vm214
      %vm219 = vmand %vm217, %vm215
      %v220 = vadd.s32 %v206, 8
      %v221 = vadd.s32 %v213, 8
      %v222 = vsel %vm218, %v220, %v206
      %v223 = vsel %vm219, %v221, %v213
      %vm224 = vcmp.ge.s32.totalorder %v222, 1
      %vm225 = vcmp.ge.s32.totalorder %v223, 1
      %v227 = vlaneseq
      %v228 = vshrl.u32 %v227, 7
      %v229 = vsub.s32 0, %v228
      %v230 = vrot.slane %v196, %v229
      %v231 = vlaneseq
      %v232 = vshrl.u32 %v231, 7
      %v233 = vsub.s32 1, %v232
      %v234 = vrot.slane %v196, %v233
      %237 = vrot.lane.b32.xlu0 %v230, 1
      %v238 = vpop.permute.xlu0 %237
      %239 = vrot.lane.b32.xlu0 %v234, 1
      %v240 = vpop.permute.xlu0 %239
      %vm241 = vcmp.lt.s32.totalorder %v198, 1
      %v242 = vsel %vm241, %v238, %v240
      %v243 = vsel %vm241, %v240, %v238
      %244 = vrot.lane.b32.xlu0 %v230, 121
      %v245 = vpop.permute.xlu0 %244
      %246 = vrot.lane.b32.xlu0 %v234, 121
      %v247 = vpop.permute.xlu0 %246
      %vm248 = vcmp.lt.s32.totalorder %v198, 121
      %v249 = vsel %vm248, %v245, %v247
      %v250 = vsel %vm248, %v247, %v245
      %v251 = vsel %vm224, %v243, %v249
      %v252 = vsel %vm225, %v242, %v250
      %vm253 = vcmp.gt.f32.partialorder %v251, %v230
      %vm254 = vcmp.gt.f32.partialorder %v252, %v234
      %vm255 = vcmp.eq.f32.partialorder %v251, %v230
      %vm256 = vcmp.eq.f32.partialorder %v252, %v234
      %vm257 = vmand %vm255, %vm224
      %vm258 = vmand %vm256, %vm225
      %vm259 = vmor %vm253, %vm257
      %vm260 = vmor %vm254, %vm258
      %v261 = vsel %vm259, 1, 0
      %v262 = vsel %vm260, 1, 0
      %vm263 = vcmp.ge.s32.totalorder %v222, 2
      %vm264 = vcmp.ge.s32.totalorder %v223, 2
      %265 = vrot.lane.b32.xlu0 %v230, 2
      %v266 = vpop.permute.xlu0 %265
      %267 = vrot.lane.b32.xlu0 %v234, 2
      %v268 = vpop.permute.xlu0 %267
      %vm269 = vcmp.lt.s32.totalorder %v198, 2
      %v270 = vsel %vm269, %v266, %v268
      %v271 = vsel %vm269, %v268, %v266
      %272 = vrot.lane.b32.xlu0 %v230, 122
      %v273 = vpop.permute.xlu0 %272
      %274 = vrot.lane.b32.xlu0 %v234, 122
      %v275 = vpop.permute.xlu0 %274
      %vm276 = vcmp.lt.s32.totalorder %v198, 122
      %v277 = vsel %vm276, %v273, %v275
      %v278 = vsel %vm276, %v275, %v273
      %v279 = vsel %vm263, %v271, %v277
      %v280 = vsel %vm264, %v270, %v278
      %vm281 = vcmp.gt.f32.partialorder %v279, %v230
      %vm282 = vcmp.gt.f32.partialorder %v280, %v234
      %vm283 = vcmp.eq.f32.partialorder %v279, %v230
      %vm284 = vcmp.eq.f32.partialorder %v280, %v234
      %vm285 = vmand %vm283, %vm263
      %vm286 = vmand %vm284, %vm264
      %vm287 = vmor %vm281, %vm285
      %vm288 = vmor %vm282, %vm286
      %v289 = vsel %vm287, 1, 0
      %v290 = vsel %vm288, 1, 0
      %v291 = vadd.s32 %v261, %v289
      %v292 = vadd.s32 %v262, %v290
      %vm293 = vcmp.ge.s32.totalorder %v222, 3
      %vm294 = vcmp.ge.s32.totalorder %v223, 3
      %295 = vrot.lane.b32.xlu0 %v230, 3
      %v296 = vpop.permute.xlu0 %295
      %297 = vrot.lane.b32.xlu0 %v234, 3
      %v298 = vpop.permute.xlu0 %297
      %vm299 = vcmp.lt.s32.totalorder %v198, 3
      %v300 = vsel %vm299, %v296, %v298
      %v301 = vsel %vm299, %v298, %v296
      %302 = vrot.lane.b32.xlu0 %v230, 123
      %v303 = vpop.permute.xlu0 %302
      %304 = vrot.lane.b32.xlu0 %v234, 123
      %v305 = vpop.permute.xlu0 %304
      %vm306 = vcmp.lt.s32.totalorder %v198, 123
      %v307 = vsel %vm306, %v303, %v305
      %v308 = vsel %vm306, %v305, %v303
      %v309 = vsel %vm293, %v301, %v307
      %v310 = vsel %vm294, %v300, %v308
      %vm311 = vcmp.gt.f32.partialorder %v309, %v230
      %vm312 = vcmp.gt.f32.partialorder %v310, %v234
      %vm313 = vcmp.eq.f32.partialorder %v309, %v230
      %vm314 = vcmp.eq.f32.partialorder %v310, %v234
      %vm315 = vmand %vm313, %vm293
      %vm316 = vmand %vm314, %vm294
      %vm317 = vmor %vm311, %vm315
      %vm318 = vmor %vm312, %vm316
      %v319 = vsel %vm317, 1, 0
      %v320 = vsel %vm318, 1, 0
      %v321 = vadd.s32 %v291, %v319
      %v322 = vadd.s32 %v292, %v320
      %vm323 = vcmp.ge.s32.totalorder %v222, 4
      %vm324 = vcmp.ge.s32.totalorder %v223, 4
      %325 = vrot.lane.b32.xlu0 %v230, 4
      %v326 = vpop.permute.xlu0 %325
      %327 = vrot.lane.b32.xlu0 %v234, 4
      %v328 = vpop.permute.xlu0 %327
      %vm329 = vcmp.lt.s32.totalorder %v198, 4
      %v330 = vsel %vm329, %v326, %v328
      %v331 = vsel %vm329, %v328, %v326
      %332 = vrot.lane.b32.xlu0 %v230, 124
      %v333 = vpop.permute.xlu0 %332
      %334 = vrot.lane.b32.xlu0 %v234, 124
      %v335 = vpop.permute.xlu0 %334
      %vm336 = vcmp.lt.s32.totalorder %v198, 124
      %v337 = vsel %vm336, %v333, %v335
      %v338 = vsel %vm336, %v335, %v333
      %v339 = vsel %vm323, %v331, %v337
      %v340 = vsel %vm324, %v330, %v338
      %vm341 = vcmp.gt.f32.partialorder %v339, %v230
      %vm342 = vcmp.gt.f32.partialorder %v340, %v234
      %vm343 = vcmp.eq.f32.partialorder %v339, %v230
      %vm344 = vcmp.eq.f32.partialorder %v340, %v234
      %vm345 = vmand %vm343, %vm323
      %vm346 = vmand %vm344, %vm324
      %vm347 = vmor %vm341, %vm345
      %vm348 = vmor %vm342, %vm346
      %v349 = vsel %vm347, 1, 0
      %v350 = vsel %vm348, 1, 0
      %v351 = vadd.s32 %v321, %v349
      %v352 = vadd.s32 %v322, %v350
      %vm353 = vcmp.ge.s32.totalorder %v222, 5
      %vm354 = vcmp.ge.s32.totalorder %v223, 5
      %355 = vrot.lane.b32.xlu0 %v230, 5
      %v356 = vpop.permute.xlu0 %355
      %357 = vrot.lane.b32.xlu0 %v234, 5
      %v358 = vpop.permute.xlu0 %357
      %vm359 = vcmp.lt.s32.totalorder %v198, 5
      %v360 = vsel %vm359, %v356, %v358
      %v361 = vsel %vm359, %v358, %v356
      %362 = vrot.lane.b32.xlu0 %v230, 125
      %v363 = vpop.permute.xlu0 %362
      %364 = vrot.lane.b32.xlu0 %v234, 125
      %v365 = vpop.permute.xlu0 %364
      %vm366 = vcmp.lt.s32.totalorder %v198, 125
      %v367 = vsel %vm366, %v363, %v365
      %v368 = vsel %vm366, %v365, %v363
      %v369 = vsel %vm353, %v361, %v367
      %v370 = vsel %vm354, %v360, %v368
      %vm371 = vcmp.gt.f32.partialorder %v369, %v230
      %vm372 = vcmp.gt.f32.partialorder %v370, %v234
      %vm373 = vcmp.eq.f32.partialorder %v369, %v230
      %vm374 = vcmp.eq.f32.partialorder %v370, %v234
      %vm375 = vmand %vm373, %vm353
      %vm376 = vmand %vm374, %vm354
      %vm377 = vmor %vm371, %vm375
      %vm378 = vmor %vm372, %vm376
      %v379 = vsel %vm377, 1, 0
      %v380 = vsel %vm378, 1, 0
      %v381 = vadd.s32 %v351, %v379
      %v382 = vadd.s32 %v352, %v380
      %vm383 = vcmp.ge.s32.totalorder %v222, 6
      %vm384 = vcmp.ge.s32.totalorder %v223, 6
      %385 = vrot.lane.b32.xlu0 %v230, 6
      %v386 = vpop.permute.xlu0 %385
      %387 = vrot.lane.b32.xlu0 %v234, 6
      %v388 = vpop.permute.xlu0 %387
      %vm389 = vcmp.lt.s32.totalorder %v198, 6
      %v390 = vsel %vm389, %v386, %v388
      %v391 = vsel %vm389, %v388, %v386
      %392 = vrot.lane.b32.xlu0 %v230, 126
      %v393 = vpop.permute.xlu0 %392
      %394 = vrot.lane.b32.xlu0 %v234, 126
      %v395 = vpop.permute.xlu0 %394
      %vm396 = vcmp.lt.s32.totalorder %v198, 126
      %v397 = vsel %vm396, %v393, %v395
      %v398 = vsel %vm396, %v395, %v393
      %v399 = vsel %vm383, %v391, %v397
      %v400 = vsel %vm384, %v390, %v398
      %vm401 = vcmp.gt.f32.partialorder %v399, %v230
      %vm402 = vcmp.gt.f32.partialorder %v400, %v234
      %vm403 = vcmp.eq.f32.partialorder %v399, %v230
      %vm404 = vcmp.eq.f32.partialorder %v400, %v234
      %vm405 = vmand %vm403, %vm383
      %vm406 = vmand %vm404, %vm384
      %vm407 = vmor %vm401, %vm405
      %vm408 = vmor %vm402, %vm406
      %v409 = vsel %vm407, 1, 0
      %v410 = vsel %vm408, 1, 0
      %v411 = vadd.s32 %v381, %v409
      %v412 = vadd.s32 %v382, %v410
      %vm413 = vcmp.ge.s32.totalorder %v222, 7
      %vm414 = vcmp.ge.s32.totalorder %v223, 7
      %415 = vrot.lane.b32.xlu0 %v230, 7
      %v416 = vpop.permute.xlu0 %415
      %417 = vrot.lane.b32.xlu0 %v234, 7
      %v418 = vpop.permute.xlu0 %417
      %vm419 = vcmp.lt.s32.totalorder %v198, 7
      %v420 = vsel %vm419, %v416, %v418
      %v421 = vsel %vm419, %v418, %v416
      %422 = vrot.lane.b32.xlu0 %v230, 127
      %v423 = vpop.permute.xlu0 %422
      %424 = vrot.lane.b32.xlu0 %v234, 127
      %v425 = vpop.permute.xlu0 %424
      %vm426 = vcmp.lt.s32.totalorder %v198, 127
      %v427 = vsel %vm426, %v423, %v425
      %v428 = vsel %vm426, %v425, %v423
      %v429 = vsel %vm413, %v421, %v427
      %v430 = vsel %vm414, %v420, %v428
      %vm431 = vcmp.gt.f32.partialorder %v429, %v230
      %vm432 = vcmp.gt.f32.partialorder %v430, %v234
      %vm433 = vcmp.eq.f32.partialorder %v429, %v230
      %vm434 = vcmp.eq.f32.partialorder %v430, %v234
      %vm435 = vmand %vm433, %vm413
      %vm436 = vmand %vm434, %vm414
      %vm437 = vmor %vm431, %vm435
      %vm438 = vmor %vm432, %vm436
      %v439 = vsel %vm437, 1, 0
      %v440 = vsel %vm438, 1, 0
      %v441 = vadd.s32 %v411, %v439
      %v442 = vadd.s32 %v412, %v440
      %vm443 = vcmp.lt.s32.totalorder %v441, 4
      %vm444 = vcmp.lt.s32.totalorder %v442, 4
      %v445 = vsel %vm443, 1, 0
      %v446 = vsel %vm444, 1, 0
      %v447 = vcvt.s32.f32 %v445
      %v448 = vcvt.s32.f32 %v446
      %v451 = vcombine.low %v447, %v448
      %v453 = vunpack.c.l.s4 1966171168
      %v454 = vunpack.c.0.s8 %v453
      %v455 = vlaneseq
      %v456 = vshrl.u32 %v455, 7
      %v457 = vsub.s32 %v454, %v456
      %v458 = vrot.slane %v451, %v457
      %v460 = vunpack.c.l.s4 1966171168
      %v461 = vunpack.c.0.s8 %v460
      %v462 = vlaneseq
      %v463 = vshrl.u32 %v462, 7
      %v464 = vsub.s32 %v461, %v463
      %v465 = vrot.slane %v458, %v464
      %467 = vst.msk [vmem:[#allocation6] sm:$0x3] %vm190, %v465
    $region17: #{tpu_custom_call.1} parent=1 // pred_fallthru
      _
    // Predicated region
    $region18: #{tpu_custom_call.1} parent=1 // pred_check
      _
    $region19: #{tpu_custom_call.1} parent=1 // pred_check_branch
      %469 = sbr.rel (0) target = $region21
    $region20: #{tpu_custom_call.1} parent=1 // pred_region
      %s471 = ssub.s32 32, 32
      %472 = vsyncadd [#allocation5], %s471
      %s474 = sshll.u32 [#allocation6], 4
      %s475 = int_to_ptr.vmem [resolvable:$true] %s474
      %477 = dma.vmem_to_hbm [thread:$0]  %s475, 32, %s1, [#allocation5]
    $region21: #{tpu_custom_call.1} parent=1 // pred_fallthru
      _
    // Predicated region
    $region22: #{tpu_custom_call.1} parent=1 // pred_check
      _
    $region23: #{tpu_custom_call.1} parent=1 // pred_check_branch
      %479 = sbr.rel (0) target = $region25
    $region24: #{tpu_custom_call.1} parent=1 // pred_region
      %480 = dma.done [#allocation5], 32
    $region25: #{tpu_custom_call.1} parent=1 // pred_fallthru
      _
    %481 = vsyncpa [#allocation4], 1
    %482 = vsyncpa [#allocation5], 1

</llo_original>
